<compile_context>
chip_gen: v7x
topology: tpu7x:2x2x1
jax: 0.10.0
libtpu: 0.0.40
codegen_flags: <defaults>
</compile_context>

<pallas_src>
import functools

import jax
import jax.numpy as jnp
from jax import lax
from jax.experimental import pallas as pl
from jax.experimental.pallas import tpu as pltpu


_STAT_LANES = 128        # lane-replicated softmax statistics (full-lane stores)
_VMEM_CAP = 32 << 20     # safe scoped-VMEM clamp for v7x's 64 MiB part


# ---------------------------------------------------------------------------
# Stage 1: fused QKV projection (one MXU matmul against the (E, 3E) weight).
# ---------------------------------------------------------------------------
def _qkv_proj_kernel(x_ref, w_ref, b_ref, q_ref, k_ref, v_ref, *,
                     embed, scale, compute_dtype):
    x = x_ref[0].astype(compute_dtype)                               # (TS, E)
    qkv = jnp.dot(x, w_ref[...],
                  preferred_element_type=jnp.float32) + b_ref[...]   # (TS, 3E) f32
    # Fold the (reference) 1/sqrt(batch) scale into Q here, in f32.
    q_ref[0] = (qkv[:, :embed] * scale).astype(q_ref.dtype)
    k_ref[0] = qkv[:, embed:2 * embed].astype(k_ref.dtype)
    v_ref[0] = qkv[:, 2 * embed:].astype(v_ref.dtype)


# ---------------------------------------------------------------------------
# Stage 2: flash-attention style causal attention with online softmax.
# ---------------------------------------------------------------------------
def _flash_attn_kernel(q_ref, k_ref, v_ref, o_ref, m_sc, l_sc, acc_sc, *,
                       n_heads, head_dim, block_q, block_k):
    q_idx = pl.program_id(1)
    kv_idx = pl.program_id(2)
    num_kv = pl.num_programs(2)

    q_start = q_idx * block_q
    k_start = kv_idx * block_k
    D = head_dim

    @pl.when(kv_idx == 0)
    def _init():
        m_sc[...] = jnp.full_like(m_sc, -jnp.inf)
        l_sc[...] = jnp.zeros_like(l_sc)
        acc_sc[...] = jnp.zeros_like(acc_sc)

    # Skip K/V tiles that lie entirely above the causal diagonal (their DMA is
    # also suppressed by the clamped index_map in the wrapper).
    @pl.when(k_start <= q_start + block_q - 1)
    def _compute():
        q = q_ref[0]                                 # (TQ, E), pre-scaled
        k = k_ref[0]                                 # (TK, E)
        v = v_ref[0]                                 # (TK, E)

        # Causal predicate from iota -- no (S, S) mask shipped from HBM.
        row = q_start + lax.broadcasted_iota(jnp.int32, (block_q, block_k), 0)
        col = k_start + lax.broadcasted_iota(jnp.int32, (block_q, block_k), 1)
        causal = row >= col

        alpha_parts = []
        pv_parts = []
        # TODO(synk): static unroll over heads; if vreg spilling shows up at
        # H=12, switch to lax.fori_loop with pl.ds(h*D, D) slicing.
        for h in range(n_heads):
            qh = q[:, h * D:(h + 1) * D]
            kh = k[:, h * D:(h + 1) * D]
            vh = v[:, h * D:(h + 1) * D]

            # 'qd,kd->qk' via contracting dims (no materialized k^T).
            s = lax.dot_general(qh, kh, (((1,), (1,)), ((), ())),
                                preferred_element_type=jnp.float32)
            s = jnp.where(causal, s, jnp.float32(-1e20))   # masked_fill semantics

            m_prev = m_sc[h]                               # (TQ, 128) lane-replicated
            l_prev = l_sc[h]
            m_new = jnp.maximum(m_prev, s.max(axis=-1, keepdims=True))
            alpha = jnp.exp(m_prev - m_new)                # lane-replicated
            p = jnp.exp(s - m_new[:, :1])                  # (TQ, TK)

            # Full-lane stat writes (lane-replicated scratch).
            l_sc[h] = alpha * l_prev + p.sum(axis=-1, keepdims=True)
            m_sc[h] = m_new

            pv_parts.append(jnp.dot(p.astype(v.dtype), vh,
                                    preferred_element_type=jnp.float32))
            if D <= _STAT_LANES:
                alpha_parts.append(alpha[:, :D])
            else:
                alpha_parts.append(jnp.broadcast_to(alpha[:, :1], (block_q, D)))

        # ONE lane-dense accumulator update per KV step (no per-head masked
        # vst.msk read-modify-writes in the hot loop).
        acc_sc[...] = (jnp.concatenate(alpha_parts, axis=-1) * acc_sc[...]
                       + jnp.concatenate(pv_parts, axis=-1))

    @pl.when(kv_idx == num_kv - 1)
    def _finalize():
        inv_parts = []
        for h in range(n_heads):
            # approx=False keeps f32 accuracy for the correctness check;
            # approx=True would route this through the (idle) EUP slot.
            inv = pl.reciprocal(l_sc[h], approx=False)     # (TQ, 128)
            if D <= _STAT_LANES:
                inv_parts.append(inv[:, :D])
            else:
                inv_parts.append(jnp.broadcast_to(inv[:, :1], (block_q, D)))
        # Single full-width (TQ, E) output store.
        o_ref[0] = (acc_sc[...] * jnp.concatenate(inv_parts, axis=-1)
                    ).astype(o_ref.dtype)


# ---------------------------------------------------------------------------
# Wrapper
# ---------------------------------------------------------------------------
def causal_self_attention(x, wq_t, bq, wk_t, bk, wv_t, bv, n_heads,
                          *, block_q=256, block_k=256, block_s=256,
                          qkv_dtype=None):
    """x: (N, S, E).  w*_t: (E, E) already transposed (x @ w).  b*: (E,).

    qkv_dtype: dtype of the q/k/v intermediates + projection weight
    (default: x.dtype; pass jnp.bfloat16 for the bf16 MXU path).
    """
    N, S, E = x.shape
    assert E % n_heads == 0
    D = E // n_heads
    scale = 1.0 / (N ** 0.5)     # NOTE: faithful to reference (1/sqrt(batch))
    qkv_dtype = jnp.dtype(x.dtype if qkv_dtype is None else qkv_dtype)

    block_q = min(block_q, S)
    block_k = min(block_k, S)
    block_s = min(block_s, S)
    assert S % block_q == 0 and S % block_k == 0 and S % block_s == 0

    # Fuse the three projections into a single (E, 3E) weight / (1, 3E) bias.
    # Weight travels in the compute dtype (halves its VMEM footprint for bf16);
    # the bias stays f32 and is added to the f32-accumulated matmul result.
    w_qkv = jnp.concatenate([wq_t, wk_t, wv_t], axis=1).astype(qkv_dtype)
    b_qkv = jnp.concatenate([bq, bk, bv]).astype(jnp.float32).reshape(1, 3 * E)

    x_item = jnp.dtype(x.dtype).itemsize
    qkv_item = qkv_dtype.itemsize

    # ------------------- stage 1: fused QKV projection --------------------
    proj_kernel = functools.partial(_qkv_proj_kernel, embed=E, scale=scale,
                                    compute_dtype=qkv_dtype)
    proj_est = (2 * (block_s * E * x_item + 3 * block_s * E * qkv_item)
                + (E * 3 * E + 3 * E) * qkv_item)
    proj_vmem = int(min(_VMEM_CAP, max(16 << 20, 2 * proj_est)))
    qkv_out_spec = pl.BlockSpec((1, block_s, E), lambda n, s: (n, s, 0))

    q, k, v = pl.pallas_call(
        proj_kernel,
        out_shape=(jax.ShapeDtypeStruct((N, S, E), qkv_dtype),) * 3,
        grid=(N, S // block_s),
        in_specs=[
            pl.BlockSpec((1, block_s, E), lambda n, s: (n, s, 0)),   # x
            pl.BlockSpec((E, 3 * E), lambda n, s: (0, 0)),           # W_qkv
            pl.BlockSpec((1, 3 * E), lambda n, s: (0, 0)),           # b_qkv
        ],
        out_specs=(qkv_out_spec, qkv_out_spec, qkv_out_spec),
        compiler_params=pltpu.CompilerParams(
            dimension_semantics=("parallel", "parallel"),
            vmem_limit_bytes=proj_vmem),
    )(x, w_qkv, b_qkv)

    # ------------------- stage 2: flash attention -------------------------
    # K/V index_maps are clamped to the causal diagonal: once a KV tile is
    # fully above the diagonal the block index stops changing, so Pallas skips
    # the re-DMA (the pl.when in the kernel already skips the compute).
    def _kv_index_map(n, qi, ki):
        last_valid = (qi * block_q + block_q - 1) // block_k
        return (n, jnp.minimum(ki, last_valid), 0)

    attn_kernel = functools.partial(
        _flash_attn_kernel, n_heads=n_heads, head_dim=D,
        block_q=block_q, block_k=block_k)
    scratch = [
        pltpu.VMEM((n_heads, block_q, _STAT_LANES), jnp.float32),  # running max
        pltpu.VMEM((n_heads, block_q, _STAT_LANES), jnp.float32),  # running sum
        pltpu.VMEM((block_q, E), jnp.float32),                     # output accumulator
    ]
    attn_est = (2 * (block_q * E + 2 * block_k * E) * qkv_item
                + 2 * block_q * E * x_item
                + (2 * n_heads * block_q * _STAT_LANES + block_q * E) * 4)
    attn_vmem = int(min(_VMEM_CAP, max(16 << 20, 2 * attn_est)))

    out = pl.pallas_call(
        attn_kernel,
        out_shape=jax.ShapeDtypeStruct((N, S, E), x.dtype),
        grid=(N, S // block_q, S // block_k),
        in_specs=[
            pl.BlockSpec((1, block_q, E), lambda n, qi, ki: (n, qi, 0)),  # Q
            pl.BlockSpec((1, block_k, E), _kv_index_map),                 # K
            pl.BlockSpec((1, block_k, E), _kv_index_map),                 # V
        ],
        out_specs=pl.BlockSpec((1, block_q, E), lambda n, qi, ki: (n, qi, 0)),
        scratch_shapes=scratch,
        compiler_params=pltpu.CompilerParams(
            dimension_semantics=("parallel", "parallel", "arbitrary"),
            vmem_limit_bytes=attn_vmem),
    )(q, k, v)
    return out


# ---------------------------------------------------------------------------
# Pure-JAX reference (re-statement of the PyTorch forward) for a sanity check.
# ---------------------------------------------------------------------------
def _reference(x, wq_t, bq, wk_t, bk, wv_t, bv, n_heads):
    N, S, E = x.shape
    D = E // n_heads
    q = (x @ wq_t + bq).reshape(N, S, n_heads, D)
    k = (x @ wk_t + bk).reshape(N, S, n_heads, D)
    v = (x @ wv_t + bv).reshape(N, S, n_heads, D)
    att = jnp.einsum('nqhd,nkhd->nhqk', q, k) * (1.0 / (N ** 0.5))
    mask = jnp.tril(jnp.ones((S, S), dtype=jnp.float32))
    att = jnp.where(mask[None, None, :, :] == 0.0, jnp.float32(-1e20), att)
    att = jax.nn.softmax(att, axis=-1)
    out = jnp.einsum('nhqk,nkhd->nqhd', att, v).reshape(N, S, E)
    return out


if __name__ == "__main__":
    # Small config consistent with the module (embedding divisible by n_heads).
    # S=64 with 16-row Q/KV tiles exercises multi-tile online softmax, the
    # causal DMA clamp and tile skipping.
    N, S, E, H = 2, 64, 64, 4
    key = jax.random.PRNGKey(0)
    ks = jax.random.split(key, 7)

    x = jax.random.normal(ks[0], (N, S, E), dtype=jnp.float32)

    # nn.Linear weights are (out, in); pre-transpose so kernels do x @ W.
    init = lambda k, shape: (jax.random.uniform(k, shape, jnp.float32,
                                                minval=-1.0, maxval=1.0)
                             / jnp.sqrt(jnp.float32(E)))
    wq_t = init(ks[1], (E, E)).T
    wk_t = init(ks[2], (E, E)).T
    wv_t = init(ks[3], (E, E)).T
    bq = init(ks[4], (E,))
    bk = init(ks[5], (E,))
    bv = init(ks[6], (E,))

    ref = _reference(x, wq_t, bq, wk_t, bk, wv_t, bv, H)

    # f32 path (tight tolerance).
    out = causal_self_attention(x, wq_t, bq, wk_t, bk, wv_t, bv, H,
                                block_q=16, block_k=16, block_s=32)
    out = jax.block_until_ready(out)
    assert out.shape == (N, S, E)
    assert jnp.allclose(out, ref, atol=1e-4, rtol=1e-4), \
        float(jnp.max(jnp.abs(out - ref)))

    # bf16 q/k/v path (loose tolerance; f32 stats/accumulation preserved).
    out_bf16 = causal_self_attention(x, wq_t, bq, wk_t, bk, wv_t, bv, H,
                                     block_q=16, block_k=16, block_s=32,
                                     qkv_dtype=jnp.bfloat16)
    out_bf16 = jax.block_until_ready(out_bf16)
    assert out_bf16.shape == (N, S, E)
    err = float(jnp.max(jnp.abs(out_bf16.astype(jnp.float32) - ref)))
    assert err < 0.25, err

    print("KERNEL_OK")
</pallas_src>

<mosaic_0001>
module attributes {stable_mosaic.version = 11 : i64} {
  func.func @_qkv_proj_kernel(%arg0: i32, %arg1: i32, %arg2: memref<1x32x64xf32, #tpu.memory_space<vmem>>, %arg3: memref<64x192xf32, #tpu.memory_space<vmem>>, %arg4: memref<1x192xf32, #tpu.memory_space<vmem>>, %arg5: memref<1x32x64xf32, #tpu.memory_space<vmem>>, %arg6: memref<1x32x64xf32, #tpu.memory_space<vmem>>, %arg7: memref<1x32x64xf32, #tpu.memory_space<vmem>>) attributes {dimension_semantics = [#tpu.dimension_semantics<parallel>, #tpu.dimension_semantics<parallel>], iteration_bounds = array<i64: 2, 2>, scalar_prefetch = 0 : i64, scratch_operands = 0 : i64, tpu.core_type = #tpu.core_type<tc>, window_params = [{transform_indices = @transform_0, window_bounds = array<i64: 1, 32, 64>}, {pipeline_mode = #tpu.pipeline_mode<synchronous>, transform_indices = @transform_1, window_bounds = array<i64: 64, 192>}, {pipeline_mode = #tpu.pipeline_mode<synchronous>, transform_indices = @transform_2, window_bounds = array<i64: 1, 192>}, {transform_indices = @transform_3, window_bounds = array<i64: 1, 32, 64>}, {transform_indices = @transform_4, window_bounds = array<i64: 1, 32, 64>}, {transform_indices = @transform_5, window_bounds = array<i64: 1, 32, 64>}]} {
    %c0 = arith.constant 0 : index
    %c0_0 = arith.constant 0 : index
    %c0_1 = arith.constant 0 : index
    %0 = vector.load %arg2[%c0, %c0_0, %c0_1] : memref<1x32x64xf32, #tpu.memory_space<vmem>>, vector<1x32x64xf32>
    %1 = vector.shape_cast %0 : vector<1x32x64xf32> to vector<32x64xf32>
    %c0_2 = arith.constant 0 : index
    %c0_3 = arith.constant 0 : index
    %2 = vector.load %arg3[%c0_2, %c0_3] : memref<64x192xf32, #tpu.memory_space<vmem>>, vector<64x192xf32>
    %cst = arith.constant dense<0.000000e+00> : vector<32x192xf32>
    %3 = tpu.matmul %1, %2, %cst {dimension_numbers = #tpu.dot_dimension_numbers<[1], [0], [0], [1], [0, 0, 1, 1], [], []>} : vector<32x64xf32>, vector<64x192xf32>, vector<32x192xf32> -> vector<32x192xf32>
    %c0_4 = arith.constant 0 : index
    %c0_5 = arith.constant 0 : index
    %4 = vector.load %arg4[%c0_4, %c0_5] : memref<1x192xf32, #tpu.memory_space<vmem>>, vector<1x192xf32>
    %5 = vector.broadcast %4 : vector<1x192xf32> to vector<32x192xf32>
    %6 = arith.addf %3, %5 : vector<32x192xf32>
    %7 = vector.extract_strided_slice %6 {offsets = [0, 0], sizes = [32, 64], strides = [1, 1]} : vector<32x192xf32> to vector<32x64xf32>
    %cst_6 = arith.constant 0.707106769 : f32
    %8 = vector.broadcast %cst_6 : f32 to vector<32x64xf32>
    %9 = arith.mulf %7, %8 : vector<32x64xf32>
    %c0_7 = arith.constant 0 : index
    %c0_8 = arith.constant 0 : index
    %c0_9 = arith.constant 0 : index
    %10 = vector.load %arg5[%c0_7, %c0_8, %c0_9] : memref<1x32x64xf32, #tpu.memory_space<vmem>>, vector<1x32x64xf32>
    %11 = vector.shape_cast %10 : vector<1x32x64xf32> to vector<32x64xf32>
    %12 = vector.shape_cast %9 : vector<32x64xf32> to vector<1x32x64xf32>
    tpu.vector_store %arg5[%c0_7, %c0_8, %c0_9], %12 {strides = array<i32>} : memref<1x32x64xf32, #tpu.memory_space<vmem>>, vector<1x32x64xf32>,
    %13 = vector.extract_strided_slice %6 {offsets = [0, 64], sizes = [32, 64], strides = [1, 1]} : vector<32x192xf32> to vector<32x64xf32>
    %c0_10 = arith.constant 0 : index
    %c0_11 = arith.constant 0 : index
    %c0_12 = arith.constant 0 : index
    %14 = vector.load %arg6[%c0_10, %c0_11, %c0_12] : memref<1x32x64xf32, #tpu.memory_space<vmem>>, vector<1x32x64xf32>
    %15 = vector.shape_cast %14 : vector<1x32x64xf32> to vector<32x64xf32>
    %16 = vector.shape_cast %13 : vector<32x64xf32> to vector<1x32x64xf32>
    tpu.vector_store %arg6[%c0_10, %c0_11, %c0_12], %16 {strides = array<i32>} : memref<1x32x64xf32, #tpu.memory_space<vmem>>, vector<1x32x64xf32>,
    %17 = vector.extract_strided_slice %6 {offsets = [0, 128], sizes = [32, 64], strides = [1, 1]} : vector<32x192xf32> to vector<32x64xf32>
    %c0_13 = arith.constant 0 : index
    %c0_14 = arith.constant 0 : index
    %c0_15 = arith.constant 0 : index
    %18 = vector.load %arg7[%c0_13, %c0_14, %c0_15] : memref<1x32x64xf32, #tpu.memory_space<vmem>>, vector<1x32x64xf32>
    %19 = vector.shape_cast %18 : vector<1x32x64xf32> to vector<32x64xf32>
    %20 = vector.shape_cast %17 : vector<32x64xf32> to vector<1x32x64xf32>
    tpu.vector_store %arg7[%c0_13, %c0_14, %c0_15], %20 {strides = array<i32>} : memref<1x32x64xf32, #tpu.memory_space<vmem>>, vector<1x32x64xf32>,
    return
  }
  func.func @transform_0(%arg0: i32, %arg1: i32) -> (i32, i32, i32) {
    %c0_i32 = arith.constant 0 : i32
    %c0_i32_0 = arith.constant 0 : i32
    return %arg0, %arg1, %c0_i32 : i32, i32, i32
  }
  func.func @transform_1(%arg0: i32, %arg1: i32) -> (i32, i32) {
    %c0_i32 = arith.constant 0 : i32
    %c0_i32_0 = arith.constant 0 : i32
    %c0_i32_1 = arith.constant 0 : i32
    return %c0_i32, %c0_i32_0 : i32, i32
  }
  func.func @transform_2(%arg0: i32, %arg1: i32) -> (i32, i32) {
    %c0_i32 = arith.constant 0 : i32
    %c0_i32_0 = arith.constant 0 : i32
    %c0_i32_1 = arith.constant 0 : i32
    return %c0_i32, %c0_i32_0 : i32, i32
  }
  func.func @transform_3(%arg0: i32, %arg1: i32) -> (i32, i32, i32) {
    %c0_i32 = arith.constant 0 : i32
    %c0_i32_0 = arith.constant 0 : i32
    return %arg0, %arg1, %c0_i32 : i32, i32, i32
  }
  func.func @transform_4(%arg0: i32, %arg1: i32) -> (i32, i32, i32) {
    %c0_i32 = arith.constant 0 : i32
    %c0_i32_0 = arith.constant 0 : i32
    return %arg0, %arg1, %c0_i32 : i32, i32, i32
  }
  func.func @transform_5(%arg0: i32, %arg1: i32) -> (i32, i32, i32) {
    %c0_i32 = arith.constant 0 : i32
    %c0_i32_0 = arith.constant 0 : i32
    return %arg0, %arg1, %c0_i32 : i32, i32, i32
  }
}

</mosaic_0001>

<llo_original>
// kernel: tpu_custom_call.1
$region0: #{tpu_custom_call.1}
  #allocation0 [shape = 'u32[]', space=smem, size = 0x4, offset = 0x4, fixed_abs, tag = 'smem constant byte address 0x4 - core index']
  #allocation1 [shape = 'u32[144,128]{1,0:T(1,128)}', space=vmem, size = 0x12000, scoped, tag = 'internal scratch']
  %s0 = inlined_call_operand.hbm [shape: f32[2,64,64], index: 0, kind: input, shape index: {}]
  %s1 = inlined_call_operand.hbm [shape: f32[64,192], index: 1, kind: input, shape index: {}]
  %s2 = inlined_call_operand.vmem [shape: f32[1,192], index: 2, kind: input, shape index: {}]
  %s3 = inlined_call_operand.hbm [shape: f32[2,64,64], index: 3, kind: output, shape index: {0}]
  %s4 = inlined_call_operand.hbm [shape: f32[2,64,64], index: 4, kind: output, shape index: {1}]
  %s5 = inlined_call_operand.hbm [shape: f32[2,64,64], index: 5, kind: output, shape index: {2}]
  %6 = xla_tuple %s3, %s4, %s5
  %s7 = sld [smem:[#allocation0]]
  $region69: #{tpu_custom_call.1} parent=0
    _
  %s9 = ssub.s32 1, %s7
  %s10 = scalar_select 0, %s9, %s7
  $region1: #{tpu_custom_call.1} parent=0
    #allocation2 [shape = 'u8[32768]{0}', space=vmem, size = 0x8000, scoped, tag = 'input window, operand 0']
    #allocation3 [shape = 's32[2]{0}', space=sflag, size = 0x8, scoped, tag = 'scoped memory for tpu_custom_call.1']
    #allocation4 [shape = 's32[2]{0}', space=sflag, size = 0x8, scoped, tag = 'scoped memory for tpu_custom_call.1']
    #allocation5 [shape = 'u8[65536]{0}', space=vmem, size = 0x10000, scoped, tag = 'input window, operand 1, single buffered']
    #allocation6 [shape = 's32[1]{0}', space=sflag, size = 0x4, scoped, tag = 'scoped memory for tpu_custom_call.1']
    #allocation7 [shape = 'u8[32768]{0}', space=vmem, size = 0x8000, scoped, tag = 'output window, operand 0']
    #allocation8 [shape = 'u8[32768]{0}', space=vmem, size = 0x8000, scoped, tag = 'output window, operand 1']
    #allocation9 [shape = 's32[2]{0}', space=sflag, size = 0x8, scoped, tag = 'scoped memory for tpu_custom_call.1']
    #allocation10 [shape = 'u8[32768]{0}', space=vmem, size = 0x8000, scoped, tag = 'output window, operand 2']
    %11 = vsyncpa [#allocation3], 0
    %s12 = scalar_lea.sflag [#allocation3], 1
    %13 = vsyncpa %s12, 0
    %14 = vsyncpa [#allocation6], 0
    %15 = vsyncpa [#allocation4], 0
    %s16 = scalar_lea.sflag [#allocation4], 1
    %17 = vsyncpa %s16, 0
    %18 = vsyncpa [#allocation9], 0
    %s19 = scalar_lea.sflag [#allocation9], 1
    %20 = vsyncpa %s19, 0
    loop: start=0, step=1, limit=6
    $region2: #{tpu_custom_call.1} parent=1 // loop_pre_header
      _
    $region3: #{tpu_custom_call.1} parent=1 // loop_header
      %s22 = sphi 0, %s26
      %p23 = scmp.ge.s32.totalorder %s22, 6
      %s29 = sphi 0, %s41
      %s30 = sphi 0, %s37
      %s31 = sphi 0, %s29
      %s32 = sphi 0, %s30
      %s33 = sphi 0, %s31
      %s34 = sphi 0, %s32
      %s46 = sphi 0, %s48
      %s49 = sphi 0, %s46
      %s50 = sphi 0, %s49
      %s66 = sphi 0, %s50
      %s70 = sphi 0, %s70
      %s72 = sphi 0, %s70
      %s73 = sphi 0, %s72
      %s87 = sphi 0, %s73
      %s91 = sphi 0, %s91
      %s93 = sphi 0, %s91
      %s94 = sphi 0, %s93
      %s108 = sphi 0, %s94
      %s116 = sphi 0, %s118
      %s119 = sphi 0, %s116
      %s120 = sphi 0, %s119
      %s136 = sphi 0, %s120
      %s144 = sphi 0, %s146
      %s147 = sphi 0, %s144
      %s148 = sphi 0, %s147
      %s164 = sphi 0, %s148
      %s172 = sphi 0, %s174
      %s175 = sphi 0, %s172
      %s176 = sphi 0, %s175
      %s192 = sphi 0, %s176
    $region4: #{tpu_custom_call.1} parent=1 // loop_header_branch
      %25 = sbr.rel (%p23) target = $region8
    $region5: #{tpu_custom_call.1} parent=1 // loop_body
      %s27 = ssub.s32 %s22, 1
      %s28 = ssub.s32 %s22, 2
      %s35 = sadd.s32 1, %s30
      %p36 = scmp.ge.s32.totalorder %s35, 2
      %s37 = scalar_select %p36, 0, %s35
      %s38 = sadd.s32 1, %s29
      %s39 = scalar_select %p36, %s38, %s29
      %p40 = scmp.ge.s32.totalorder %s39, 2
      %s41 = scalar_select %p40, 0, %s39
      %s42 = ssub.s32 %s29, %s41
      %s43 = ssub.s32 %s30, %s37
      %s44 = sor.u32 %s42, %s43
      %p45 = scmp.eq.s32.totalorder %s44, 0
      %s47 = sadd.s32 %s46, 1
      %s48 = scalar_select %p45, %s46, %s47
      %p51 = pneg %p45
      %p52 = scmp.eq.s32.totalorder %s22, 3
      %p53 = por %p51, %p52
      %p54 = scmp.ne.s32.totalorder %s46, %s49
      %p55 = scmp.eq.s32.totalorder %s22, 0
      %p56 = por %p54, %p55
      %p57 = scmp.ne.s32.totalorder %s46, %s49
      %p58 = scmp.eq.s32.totalorder %s27, 3
      %p59 = por %p57, %p58
      %p60 = scmp.ne.s32.totalorder %s49, %s50
      %p61 = scmp.eq.s32.totalorder %s27, 0
      %p62 = por %p60, %p61
      %p63 = scmp.ne.s32.totalorder %s49, %s50
      %p64 = scmp.eq.s32.totalorder %s28, 3
      %p65 = por %p63, %p64
      %p67 = scmp.ne.s32.totalorder %s50, %s66
      %p68 = scmp.eq.s32.totalorder %s28, 0
      %p69 = por %p67, %p68
      %s71 = sadd.s32 %s70, 1
      %p74 = scmp.eq.s32.totalorder %s22, 3
      %p75 = scmp.ne.s32.totalorder %s70, %s72
      %p76 = scmp.eq.s32.totalorder %s22, 0
      %p77 = por %p75, %p76
      %p78 = scmp.ne.s32.totalorder %s70, %s72
      %p79 = scmp.eq.s32.totalorder %s27, 3
      %p80 = por %p78, %p79
      %p81 = scmp.ne.s32.totalorder %s72, %s73
      %p82 = scmp.eq.s32.totalorder %s27, 0
      %p83 = por %p81, %p82
      %p84 = scmp.ne.s32.totalorder %s72, %s73
      %p85 = scmp.eq.s32.totalorder %s28, 3
      %p86 = por %p84, %p85
      %p88 = scmp.ne.s32.totalorder %s73, %s87
      %p89 = scmp.eq.s32.totalorder %s28, 0
      %p90 = por %p88, %p89
      %s92 = sadd.s32 %s91, 1
      %p95 = scmp.eq.s32.totalorder %s22, 3
      %p96 = scmp.ne.s32.totalorder %s91, %s93
      %p97 = scmp.eq.s32.totalorder %s22, 0
      %p98 = por %p96, %p97
      %p99 = scmp.ne.s32.totalorder %s91, %s93
      %p100 = scmp.eq.s32.totalorder %s27, 3
      %p101 = por %p99, %p100
      %p102 = scmp.ne.s32.totalorder %s93, %s94
      %p103 = scmp.eq.s32.totalorder %s27, 0
      %p104 = por %p102, %p103
      %p105 = scmp.ne.s32.totalorder %s93, %s94
      %p106 = scmp.eq.s32.totalorder %s28, 3
      %p107 = por %p105, %p106
      %p109 = scmp.ne.s32.totalorder %s94, %s108
      %p110 = scmp.eq.s32.totalorder %s28, 0
      %p111 = por %p109, %p110
      %s112 = ssub.s32 %s29, %s41
      %s113 = ssub.s32 %s30, %s37
      %s114 = sor.u32 %s112, %s113
      %p115 = scmp.eq.s32.totalorder %s114, 0
      %s117 = sadd.s32 %s116, 1
      %s118 = scalar_select %p115, %s116, %s117
      %p121 = pneg %p115
      %p122 = scmp.eq.s32.totalorder %s22, 3
      %p123 = por %p121, %p122
      %p124 = scmp.ne.s32.totalorder %s116, %s119
      %p125 = scmp.eq.s32.totalorder %s22, 0
      %p126 = por %p124, %p125
      %p127 = scmp.ne.s32.totalorder %s116, %s119
      %p128 = scmp.eq.s32.totalorder %s27, 3
      %p129 = por %p127, %p128
      %p130 = scmp.ne.s32.totalorder %s119, %s120
      %p131 = scmp.eq.s32.totalorder %s27, 0
      %p132 = por %p130, %p131
      %p133 = scmp.ne.s32.totalorder %s119, %s120
      %p134 = scmp.eq.s32.totalorder %s28, 3
      %p135 = por %p133, %p134
      %p137 = scmp.ne.s32.totalorder %s120, %s136
      %p138 = scmp.eq.s32.totalorder %s28, 0
      %p139 = por %p137, %p138
      %s140 = ssub.s32 %s29, %s41
      %s141 = ssub.s32 %s30, %s37
      %s142 = sor.u32 %s140, %s141
      %p143 = scmp.eq.s32.totalorder %s142, 0
      %s145 = sadd.s32 %s144, 1
      %s146 = scalar_select %p143, %s144, %s145
      %p149 = pneg %p143
      %p150 = scmp.eq.s32.totalorder %s22, 3
      %p151 = por %p149, %p150
      %p152 = scmp.ne.s32.totalorder %s144, %s147
      %p153 = scmp.eq.s32.totalorder %s22, 0
      %p154 = por %p152, %p153
      %p155 = scmp.ne.s32.totalorder %s144, %s147
      %p156 = scmp.eq.s32.totalorder %s27, 3
      %p157 = por %p155, %p156
      %p158 = scmp.ne.s32.totalorder %s147, %s148
      %p159 = scmp.eq.s32.totalorder %s27, 0
      %p160 = por %p158, %p159
      %p161 = scmp.ne.s32.totalorder %s147, %s148
      %p162 = scmp.eq.s32.totalorder %s28, 3
      %p163 = por %p161, %p162
      %p165 = scmp.ne.s32.totalorder %s148, %s164
      %p166 = scmp.eq.s32.totalorder %s28, 0
      %p167 = por %p165, %p166
      %s168 = ssub.s32 %s29, %s41
      %s169 = ssub.s32 %s30, %s37
      %s170 = sor.u32 %s168, %s169
      %p171 = scmp.eq.s32.totalorder %s170, 0
      %s173 = sadd.s32 %s172, 1
      %s174 = scalar_select %p171, %s172, %s173
      %p177 = pneg %p171
      %p178 = scmp.eq.s32.totalorder %s22, 3
      %p179 = por %p177, %p178
      %p180 = scmp.ne.s32.totalorder %s172, %s175
      %p181 = scmp.eq.s32.totalorder %s22, 0
      %p182 = por %p180, %p181
      %p183 = scmp.ne.s32.totalorder %s172, %s175
      %p184 = scmp.eq.s32.totalorder %s27, 3
      %p185 = por %p183, %p184
      %p186 = scmp.ne.s32.totalorder %s175, %s176
      %p187 = scmp.eq.s32.totalorder %s27, 0
      %p188 = por %p186, %p187
      %p189 = scmp.ne.s32.totalorder %s175, %s176
      %p190 = scmp.eq.s32.totalorder %s28, 3
      %p191 = por %p189, %p190
      %p193 = scmp.ne.s32.totalorder %s176, %s192
      %p194 = scmp.eq.s32.totalorder %s28, 0
      %p195 = por %p193, %p194
      %p196 = scmp.le.s32.totalorder 1, %s22
      %p197 = scmp.lt.s32.totalorder %s22, 5
      %p198 = pnand %p196, %p197
      %p199 = pneg %p198
      // Predicated region
      $region9: #{tpu_custom_call.1} parent=5 // pred_check
        _
      $region10: #{tpu_custom_call.1} parent=5 // pred_check_branch
        %201 = sbr.rel (%p198) target = $region12
      $region11: #{tpu_custom_call.1} parent=5 // pred_region
        %s202 = ssub.s32 %s22, 1
        // Predicated region
        $region13: #{tpu_custom_call.1} parent=11 // pred_check
          %p203 = pneg %p83
        $region14: #{tpu_custom_call.1} parent=11 // pred_check_branch
          %205 = sbr.rel (%p203) target = $region16
        $region15: #{tpu_custom_call.1} parent=11 // pred_region
          %s207 = ssub.s32 2048, 2048
          %208 = vsyncadd [#allocation6], %s207
          %s209 = sshll.u32 [#allocation5], 4
          %s210 = int_to_ptr.vmem [resolvable:$true] %s209
          %215 = dma.hbm_to_vmem [thread:$0]  %s1, 2048, %s210, [#allocation6], 256, 256, 16
        $region16: #{tpu_custom_call.1} parent=11 // pred_fallthru
          _
        // Predicated region
        $region17: #{tpu_custom_call.1} parent=11 // pred_check
          %p216 = pneg %p104
        $region18: #{tpu_custom_call.1} parent=11 // pred_check_branch
          %218 = sbr.rel (%p216) target = $region20
        $region19: #{tpu_custom_call.1} parent=11 // pred_region
          _
        $region20: #{tpu_custom_call.1} parent=11 // pred_fallthru
          _
      $region12: #{tpu_custom_call.1} parent=5 // pred_fallthru
        _
      %p219 = scmp.lt.s32.totalorder %s22, 4
      // Predicated region
      $region21: #{tpu_custom_call.1} parent=5 // pred_check
        %p220 = pneg %p219
      $region22: #{tpu_custom_call.1} parent=5 // pred_check_branch
        %222 = sbr.rel (%p220) target = $region24
      $region23: #{tpu_custom_call.1} parent=5 // pred_region
        // Predicated region
        $region25: #{tpu_custom_call.1} parent=23 // pred_check
          %p223 = pneg %p56
        $region26: #{tpu_custom_call.1} parent=23 // pred_check_branch
          %225 = sbr.rel (%p223) target = $region28
        $region27: #{tpu_custom_call.1} parent=23 // pred_region
          %s226 = sand.u32 %s46, 1
          %s227 = scalar_lea.sflag [#allocation3], %s226
          %s228 = sand.u32 %s46, 1
          %s229 = smul.addr %s228, 32
          %s230 = scalar_lea.vmem [#allocation2], %s229
          %s231 = smul.u32 4, %s30
          %s233 = ssub.s32 512, 512
          %234 = vsyncadd %s227, %s233
          %s235 = smul.addr %s29, 8
          %s236 = sadd.s32 %s231, %s235
          %s237 = smul.addr %s236, 128
          %s238 = scalar_lea.hbm %s0, %s237
          %s239 = sshll.u32 %s230, 4
          %s240 = int_to_ptr.vmem [resolvable:$true] %s239
          %245 = dma.hbm_to_vmem [thread:$0]  %s238, 512, %s240, %s227, 128, 128, 8
        $region28: #{tpu_custom_call.1} parent=23 // pred_fallthru
          _
      $region24: #{tpu_custom_call.1} parent=5 // pred_fallthru
        _
      %p246 = scmp.le.s32.totalorder 1, %s22
      %p247 = scmp.lt.s32.totalorder %s22, 5
      %p248 = pnand %p246, %p247
      %p249 = pneg %p248
      // Predicated region
      $region29: #{tpu_custom_call.1} parent=5 // pred_check
        _
      $region30: #{tpu_custom_call.1} parent=5 // pred_check_branch
        %251 = sbr.rel (%p248) target = $region32
      $region31: #{tpu_custom_call.1} parent=5 // pred_region
        %s252 = ssub.s32 %s22, 1
        %s253 = sand.u32 %s49, 1
        %s254 = scalar_lea.sflag [#allocation3], %s253
        %s255 = sand.u32 %s49, 1
        %s256 = smul.addr %s255, 32
        %s257 = scalar_lea.vmem [#allocation2], %s256
        // Predicated region
        $region33: #{tpu_custom_call.1} parent=31 // pred_check
          %p258 = pneg %p62
        $region34: #{tpu_custom_call.1} parent=31 // pred_check_branch
          %260 = sbr.rel (%p258) target = $region36
        $region35: #{tpu_custom_call.1} parent=31 // pred_region
          %261 = dma.done %s254, 512
        $region36: #{tpu_custom_call.1} parent=31 // pred_fallthru
          _
        // Predicated region
        $region37: #{tpu_custom_call.1} parent=31 // pred_check
          %p262 = pneg %p83
        $region38: #{tpu_custom_call.1} parent=31 // pred_check_branch
          %264 = sbr.rel (%p262) target = $region40
        $region39: #{tpu_custom_call.1} parent=31 // pred_region
          %265 = dma.done [#allocation6], 2048
        $region40: #{tpu_custom_call.1} parent=31 // pred_fallthru
          _
        %s266 = sand.u32 %s49, 1
        %s267 = scalar_lea.sflag [#allocation3], %s266
        %s268 = sand.u32 %s49, 1
        %s269 = smul.addr %s268, 32
        %s270 = scalar_lea.vmem [#allocation2], %s269
        %p271 = pneg %p62
        %p272 = pneg %p59
        %p273 = pneg %p83
        %p274 = pneg %p80
        %p275 = pneg %p104
        %p276 = pneg %p101
        %p277 = pneg %p132
        %p278 = pneg %p129
        %s279 = sand.u32 %s119, 1
        %s280 = scalar_lea.sflag [#allocation4], %s279
        %s281 = sand.u32 %s119, 1
        %s282 = smul.addr %s281, 32
        %s283 = scalar_lea.vmem [#allocation7], %s282
        %p284 = pneg %p160
        %p285 = pneg %p157
        %s286 = sand.u32 %s27, 1
        %s287 = scalar_lea.sflag [#allocation9], %s286
        %s288 = sand.u32 %s147, 1
        %s289 = smul.addr %s288, 32
        %s290 = scalar_lea.vmem [#allocation8], %s289
        %p291 = pneg %p188
        %p292 = pneg %p185
        %s293 = sand.u32 %s27, 1
        %s294 = scalar_lea.sflag [#allocation9], %s293
        %s295 = sand.u32 %s175, 1
        %s296 = smul.addr %s295, 32
        %s297 = scalar_lea.vmem [#allocation10], %s296
        %s298 = smul.u32 4, %s32
        %s299 = smul.u32 4, %s32
        %s300 = smul.u32 4, %s32
        %s301 = smul.u32 4, %s32
        %v302 = vld [vmem:[%s257] sm:$0xff]
        %v303 = vld [vmem:[%s257 + $0x8] sm:$0xff]
        %v304 = vld [vmem:[%s257 + $0x10] sm:$0xff]
        %v305 = vld [vmem:[%s257 + $0x18] sm:$0xff]
        %v306 = vld [vmem:[#allocation5] sm:$0xff]
        %v307 = vld [vmem:[#allocation5 + $0x8] sm:$0xff]
        %v308 = vld [vmem:[#allocation5 + $0x10] sm:$0xff]
        %v309 = vld [vmem:[#allocation5 + $0x18] sm:$0xff]
        %v310 = vld [vmem:[#allocation5 + $0x20] sm:$0xff]
        %v311 = vld [vmem:[#allocation5 + $0x28] sm:$0xff]
        %v312 = vld [vmem:[#allocation5 + $0x30] sm:$0xff]
        %v313 = vld [vmem:[#allocation5 + $0x38] sm:$0xff]
        %v314 = vld [vmem:[#allocation5 + $0x40] sm:$0xff]
        %v315 = vld [vmem:[#allocation5 + $0x48] sm:$0xff]
        %v316 = vld [vmem:[#allocation5 + $0x50] sm:$0xff]
        %v317 = vld [vmem:[#allocation5 + $0x58] sm:$0xff]
        %v318 = vld [vmem:[#allocation5 + $0x60] sm:$0xff]
        %v319 = vld [vmem:[#allocation5 + $0x68] sm:$0xff]
        %v320 = vld [vmem:[#allocation5 + $0x70] sm:$0xff]
        %v321 = vld [vmem:[#allocation5 + $0x78] sm:$0xff]
        %v322 = vld [vmem:[%s2] sm:$0x3]
        %v324 = vlaneseq
        %v325 = vshrl.u32 %v324, 7
        %v326 = vsub.s32 0, %v325
        %v327 = vrot.slane %v322, %v326
        %v328 = vlaneseq
        %v329 = vshrl.u32 %v328, 7
        %v330 = vsub.s32 1, %v329
        %v331 = vrot.slane %v322, %v330
        %vm334 = vcmask 523264
        %v336 = vsel %vm334, %v302, 0
        %v339 = vsel %vm334, %v303, 0
        %v342 = vsel %vm334, %v304, 0
        %v345 = vsel %vm334, %v305, 0
        %347 = vmatprep.subr.mxu0 %v307
        %348 = vmatpush1.msra.mxu0 %v306
        %349 = vmatprep.subr.mxu0 %v309
        %350 = vmatpush1.msra.mxu0 %v308
        %351 = vmatprep.subr.mxu0 %v311
        %352 = vmatpush1.msra.mxu0 %v310
        %353 = vmatprep.subr.mxu0 %v313
        %354 = vmatpush1.msra.mxu0 %v312
        %355 = vmatprep.subr.mxu0 %v315
        %356 = vmatpush1.msra.mxu0 %v314
        %357 = vmatprep.subr.mxu0 %v317
        %358 = vmatpush1.msra.mxu0 %v316
        %359 = vmatprep.subr.mxu0 %v319
        %360 = vmatpush1.msra.mxu0 %v318
        %361 = vmatprep.subr.mxu0 %v321
        %362 = vmatpush1.msra.mxu0 %v320
        %363 = vmatprep.subr.mxu0 0.0
        %364 = vmatpush1.msra.mxu0 0.0
        %365 = vmatprep.subr.mxu0 0.0
        %366 = vmatpush1.msra.mxu0 0.0
        %367 = vmatprep.subr.mxu0 0.0
        %368 = vmatpush1.msra.mxu0 0.0
        %369 = vmatprep.subr.mxu0 0.0
        %370 = vmatpush1.msra.mxu0 0.0
        %371 = vmatprep.subr.mxu0 0.0
        %372 = vmatpush1.msra.mxu0 0.0
        %373 = vmatprep.subr.mxu0 0.0
        %374 = vmatpush1.msra.mxu0 0.0
        %375 = vmatprep.subr.mxu0 0.0
        %376 = vmatpush1.msra.mxu0 0.0
        %377 = vmatprep.subr.mxu0 0.0
        %378 = vmatpush1.msra.mxu0 0.0
        %379 = vmatprep.subr.mxu0 0.0
        %380 = vmatpush1.msra.mxu0 0.0
        %381 = vmatprep.subr.mxu0 0.0
        %382 = vmatpush1.msra.mxu0 0.0
        %383 = vmatprep.subr.mxu0 0.0
        %384 = vmatpush1.msra.mxu0 0.0
        %385 = vmatprep.subr.mxu0 0.0
        %386 = vmatpush1.msra.mxu0 0.0
        %387 = vmatprep.subr.mxu0 0.0
        %388 = vmatpush1.msra.mxu0 0.0
        %389 = vmatprep.subr.mxu0 0.0
        %390 = vmatpush1.msra.mxu0 0.0
        %391 = vmatprep.subr.mxu0 0.0
        %392 = vmatpush1.msra.mxu0 0.0
        %393 = vmatprep.subr.mxu0 0.0
        %394 = vmatpush1.msra.mxu0 0.0
        %395 = vmatprep.subr.mxu0 0.0
        %396 = vmatpush1.msra.mxu0 0.0
        %397 = vmatprep.subr.mxu0 0.0
        %398 = vmatpush1.msra.mxu0 0.0
        %399 = vmatprep.subr.mxu0 0.0
        %400 = vmatpush1.msra.mxu0 0.0
        %401 = vmatprep.subr.mxu0 0.0
        %402 = vmatpush1.msra.mxu0 0.0
        %403 = vmatprep.subr.mxu0 0.0
        %404 = vmatpush1.msra.mxu0 0.0
        %405 = vmatprep.subr.mxu0 0.0
        %406 = vmatpush1.msra.mxu0 0.0
        %407 = vmatprep.subr.mxu0 0.0
        %408 = vmatpush1.msra.mxu0 0.0
        %409 = vmatprep.subr.mxu0 0.0
        %410 = vmatpush1.msra.mxu0 0.0
        %411 = vmatprep.mubr.f32.mxu0 0.0
        %412 = vmatmul.mubr.f32.gmra.mrb[0].mxu0 %v336
        %v413 = vpop.f32.mrb[0].mxu0
        %v414 = vadd.f32 %v327, %v413
        %v415 = vpop.f32.mrb[0].mxu0
        %v416 = vadd.f32 %v331, %v415
        %417 = vmatprep.mubr.f32.mxu0 0.0
        %418 = vmatmul.mubr.f32.gmra.mrb[0].mxu0 %v339
        %v419 = vpop.f32.mrb[0].mxu0
        %v420 = vadd.f32 %v327, %v419
        %v421 = vpop.f32.mrb[0].mxu0
        %v422 = vadd.f32 %v331, %v421
        %423 = vmatprep.mubr.f32.mxu0 0.0
        %424 = vmatmul.mubr.f32.gmra.mrb[0].mxu0 %v342
        %v425 = vpop.f32.mrb[0].mxu0
        %v426 = vadd.f32 %v327, %v425
        %v427 = vpop.f32.mrb[0].mxu0
        %v428 = vadd.f32 %v331, %v427
        %429 = vmatprep.mubr.f32.mxu0 0.0
        %430 = vmatmul.mubr.f32.gmra.mrb[0].mxu0 %v345
        %v431 = vpop.f32.mrb[0].mxu0
        %v432 = vadd.f32 %v327, %v431
        %v433 = vpop.f32.mrb[0].mxu0
        %v434 = vadd.f32 %v331, %v433
        %435 = vdwg.mxu0
        %v436 = vmul.f32 %v414, 0.70710677
        %v437 = vmul.f32 %v420, 0.70710677
        %v438 = vmul.f32 %v426, 0.70710677
        %v439 = vmul.f32 %v432, 0.70710677
        %440 = vst.msk [vmem:[%s283] sm:$0xff] %vm334, %v436
        %441 = vst.msk [vmem:[%s283 + $0x8] sm:$0xff] %vm334, %v437
        %442 = vst.msk [vmem:[%s283 + $0x10] sm:$0xff] %vm334, %v438
        %443 = vst.msk [vmem:[%s283 + $0x18] sm:$0xff] %vm334, %v439
        %448 = vrot.lane.b32.xlu0 %v414, 64
        %v449 = vpop.permute.xlu0 %448
        %450 = vrot.lane.b32.xlu0 %v420, 64
        %v451 = vpop.permute.xlu0 %450
        %452 = vrot.lane.b32.xlu0 %v426, 64
        %v453 = vpop.permute.xlu0 %452
        %454 = vrot.lane.b32.xlu0 %v432, 64
        %v455 = vpop.permute.xlu0 %454
        %460 = vst.msk [vmem:[%s290] sm:$0xff] %vm334, %v449
        %461 = vst.msk [vmem:[%s290 + $0x8] sm:$0xff] %vm334, %v451
        %462 = vst.msk [vmem:[%s290 + $0x10] sm:$0xff] %vm334, %v453
        %463 = vst.msk [vmem:[%s290 + $0x18] sm:$0xff] %vm334, %v455
        %464 = vst.msk [vmem:[%s297] sm:$0xff] %vm334, %v416
        %465 = vst.msk [vmem:[%s297 + $0x8] sm:$0xff] %vm334, %v422
        %466 = vst.msk [vmem:[%s297 + $0x10] sm:$0xff] %vm334, %v428
        %467 = vst.msk [vmem:[%s297 + $0x18] sm:$0xff] %vm334, %v434
        %s468 = sand.u32 %s119, 1
        %s469 = scalar_lea.sflag [#allocation4], %s468
        %s470 = sand.u32 %s119, 1
        %s471 = smul.addr %s470, 32
        %s472 = scalar_lea.vmem [#allocation7], %s471
        %s473 = sand.u32 %s27, 1
        %s474 = scalar_lea.sflag [#allocation9], %s473
        %s475 = sand.u32 %s147, 1
        %s476 = smul.addr %s475, 32
        %s477 = scalar_lea.vmem [#allocation8], %s476
        %s478 = sand.u32 %s27, 1
        %s479 = scalar_lea.sflag [#allocation9], %s478
        %s480 = sand.u32 %s175, 1
        %s481 = smul.addr %s480, 32
        %s482 = scalar_lea.vmem [#allocation10], %s481
        // Predicated region
        $region41: #{tpu_custom_call.1} parent=31 // pred_check
          %p483 = pneg %p129
        $region42: #{tpu_custom_call.1} parent=31 // pred_check_branch
          %485 = sbr.rel (%p483) target = $region44
        $region43: #{tpu_custom_call.1} parent=31 // pred_region
          %s486 = smul.u32 4, %s32
          %s488 = ssub.s32 512, 512
          %489 = vsyncadd %s469, %s488
          %s490 = smul.addr %s31, 8
          %s491 = sadd.s32 %s486, %s490
          %s492 = smul.addr %s491, 128
          %s493 = scalar_lea.hbm %s3, %s492
          %s494 = sshll.u32 %s472, 4
          %s495 = int_to_ptr.vmem [resolvable:$true] %s494
          %500 = dma.vmem_to_hbm [thread:$0]  %s495, 512, %s493, %s469, 128, 128, 8
        $region44: #{tpu_custom_call.1} parent=31 // pred_fallthru
          _
        // Predicated region
        $region45: #{tpu_custom_call.1} parent=31 // pred_check
          %p501 = pneg %p157
        $region46: #{tpu_custom_call.1} parent=31 // pred_check_branch
          %503 = sbr.rel (%p501) target = $region48
        $region47: #{tpu_custom_call.1} parent=31 // pred_region
          %s504 = smul.u32 4, %s32
          %s506 = ssub.s32 512, 512
          %507 = vsyncadd %s474, %s506
          %s508 = smul.addr %s31, 8
          %s509 = sadd.s32 %s504, %s508
          %s510 = smul.addr %s509, 128
          %s511 = scalar_lea.hbm %s4, %s510
          %s512 = sshll.u32 %s477, 4
          %s513 = int_to_ptr.vmem [resolvable:$true] %s512
          %518 = dma.vmem_to_hbm [thread:$0]  %s513, 512, %s511, %s474, 128, 128, 8
        $region48: #{tpu_custom_call.1} parent=31 // pred_fallthru
          _
        // Predicated region
        $region49: #{tpu_custom_call.1} parent=31 // pred_check
          %p519 = pneg %p185
        $region50: #{tpu_custom_call.1} parent=31 // pred_check_branch
          %521 = sbr.rel (%p519) target = $region52
        $region51: #{tpu_custom_call.1} parent=31 // pred_region
          %s522 = smul.u32 4, %s32
          %s524 = ssub.s32 512, 512
          %525 = vsyncadd %s479, %s524
          %s526 = smul.addr %s31, 8
          %s527 = sadd.s32 %s522, %s526
          %s528 = smul.addr %s527, 128
          %s529 = scalar_lea.hbm %s5, %s528
          %s530 = sshll.u32 %s482, 4
          %s531 = int_to_ptr.vmem [resolvable:$true] %s530
          %536 = dma.vmem_to_hbm [thread:$0]  %s531, 512, %s529, %s479, 128, 128, 8
        $region52: #{tpu_custom_call.1} parent=31 // pred_fallthru
          _
      $region32: #{tpu_custom_call.1} parent=5 // pred_fallthru
        _
      %p537 = scmp.le.s32.totalorder 2, %s22
      // Predicated region
      $region53: #{tpu_custom_call.1} parent=5 // pred_check
        %p538 = pneg %p537
      $region54: #{tpu_custom_call.1} parent=5 // pred_check_branch
        %540 = sbr.rel (%p538) target = $region56
      $region55: #{tpu_custom_call.1} parent=5 // pred_region
        %s541 = ssub.s32 %s22, 2
        // Predicated region
        $region57: #{tpu_custom_call.1} parent=55 // pred_check
          %p542 = pneg %p135
        $region58: #{tpu_custom_call.1} parent=55 // pred_check_branch
          %544 = sbr.rel (%p542) target = $region60
        $region59: #{tpu_custom_call.1} parent=55 // pred_region
          %s545 = sand.u32 %s120, 1
          %s546 = scalar_lea.sflag [#allocation4], %s545
          %s547 = sand.u32 %s120, 1
          %s548 = smul.addr %s547, 32
          %s549 = scalar_lea.vmem [#allocation7], %s548
          %550 = dma.done %s546, 512
        $region60: #{tpu_custom_call.1} parent=55 // pred_fallthru
          _
        // Predicated region
        $region61: #{tpu_custom_call.1} parent=55 // pred_check
          %p551 = pneg %p163
        $region62: #{tpu_custom_call.1} parent=55 // pred_check_branch
          %553 = sbr.rel (%p551) target = $region64
        $region63: #{tpu_custom_call.1} parent=55 // pred_region
          %s554 = sand.u32 %s28, 1
          %s555 = scalar_lea.sflag [#allocation9], %s554
          %s556 = sand.u32 %s148, 1
          %s557 = smul.addr %s556, 32
          %s558 = scalar_lea.vmem [#allocation8], %s557
          %559 = dma.done %s555, 512
        $region64: #{tpu_custom_call.1} parent=55 // pred_fallthru
          _
        // Predicated region
        $region65: #{tpu_custom_call.1} parent=55 // pred_check
          %p560 = pneg %p191
        $region66: #{tpu_custom_call.1} parent=55 // pred_check_branch
          %562 = sbr.rel (%p560) target = $region68
        $region67: #{tpu_custom_call.1} parent=55 // pred_region
          %s563 = sand.u32 %s28, 1
          %s564 = scalar_lea.sflag [#allocation9], %s563
          %s565 = sand.u32 %s176, 1
          %s566 = smul.addr %s565, 32
          %s567 = scalar_lea.vmem [#allocation10], %s566
          %568 = dma.done %s564, 512
        $region68: #{tpu_custom_call.1} parent=55 // pred_fallthru
          _
      $region56: #{tpu_custom_call.1} parent=5 // pred_fallthru
        _
    $region6: #{tpu_custom_call.1} parent=1 // loop_footer
      %s26 = sadd.s32 1, %s22
    $region7: #{tpu_custom_call.1} parent=1 // loop_footer_branch
      %21 = sbr.rel target = $region3
    $region8: #{tpu_custom_call.1} parent=1 // loop_exit
      _
    %569 = vsyncpa [#allocation3], 1
    %s570 = scalar_lea.sflag [#allocation3], 1
    %571 = vsyncpa %s570, 1
    %572 = vsyncpa [#allocation6], 1
    %573 = vsyncpa [#allocation4], 1
    %s574 = scalar_lea.sflag [#allocation4], 1
    %575 = vsyncpa %s574, 1
    %576 = vsyncpa [#allocation9], 1
    %s577 = scalar_lea.sflag [#allocation9], 1
    %578 = vsyncpa %s577, 1

</llo_original>
